<compile_context>
chip_gen: v6e
topology: v6e:2x2x1
jax: 0.10.0
libtpu: 0.0.40
codegen_flags: <defaults>
</compile_context>

<pallas_src>
import functools

import jax
import jax.numpy as jnp
from jax.experimental import pallas as pl
from jax.experimental.pallas import tpu as pltpu

LANES = 128  # lane width of one TPU vreg row


def switchbox_kernel(leaves_ref, wa_ref, o_ref):
    """leaves_ref: (BR,128) lane-packed leaves; wa_ref: (nsb,BR,128) w_a; o_ref: (BR,128)."""
    nsb = wa_ref.shape[0]
    lanes = leaves_ref.shape[-1]

    prev = leaves_ref[...]                       # (BR, 128)
    for sel in range(nsb):                       # static, fully unrolled (nsb <= 7)
        d = 1 << sel
        # Operand b sits d lanes to the right: b[i] = prev[(i + d) mod 128].
        # Partners never cross a 2**nsb-lane tree boundary, so one roll reduces
        # every lane-packed tree at once; wrapped lanes only feed discarded results.
        b = pltpu.roll(prev, shift=lanes - d, axis=1)
        w_a = wa_ref[sel]                        # lazy per-layer slice, no big temporaries
        # b + w_a*(a - b) == 0.5*((1+s)*a + (1-s)*b) == Mux(s, a, b)
        prev = b + w_a * (prev - b)

    o_ref[...] = prev                            # lane t*2**nsb of each row = result of tree t


@functools.partial(jax.jit, static_argnames=("block_rows",))
def switchbox_forward(x, selw, constw, noise, cnoise, *, block_rows=512):
    """Batched SwitchboxElement forward.

    x:      (N, xlen)        input leaves per element
    selw:   (N, nsb)         mux_selector_weights per element
    constw: (N,)             trained_const_weight per element
    noise:  (N, nsb, 2**nsb) per-mux selector-noise samples (layer, operand-a lane)
    cnoise: (N,)             noise sample for the trained const
    returns (N,) f32 -- prev[0] of each element's mux tree.
    """
    N, xlen = x.shape
    nsb = selw.shape[1]
    assert 1 <= nsb <= 7, "2**nsb leaves must fit in the 128-lane vreg row"
    n_leaf = 1 << nsb
    tpr = LANES // n_leaf                        # trees lane-packed per vreg row

    # ---- row-tile selection -------------------------------------------------
    def _round_up(a, m):
        return -(-a // m) * m

    rows_min = -(-N // tpr)
    rows_aligned = _round_up(rows_min, 8)        # sublane (8,128) tiling constraint
    # Big tiles (review: 512-1024) but keep >= 2 grid blocks when the data allows
    # it so v7x's two TensorCores both get work under dimension_semantics=parallel.
    eff_br = min(block_rows, max(8, _round_up(max(rows_aligned // 2, 1), 8)))
    rows = _round_up(rows_aligned, eff_br)
    n_tot = rows * tpr
    n_pad = n_tot - N

    # ---- pad the element batch to a whole number of (eff_br, 128) blocks -----
    if n_pad:
        x = jnp.concatenate([x, jnp.zeros((n_pad, xlen), x.dtype)])
        selw = jnp.concatenate([selw, jnp.zeros((n_pad, nsb), selw.dtype)])
        constw = jnp.concatenate([constw, jnp.zeros((n_pad,), constw.dtype)])
        noise = jnp.concatenate([noise, jnp.zeros((n_pad, nsb, n_leaf), noise.dtype)])
        cnoise = jnp.concatenate([cnoise, jnp.zeros((n_pad,), cnoise.dtype)])

    # ---- leaves: x[:n_keep], -1.0 padding, noisy trained const in last leaf ---
    # NOTE: like the reference, only the first 2**nsb - 1 entries of x are consumed;
    # any extra entries are intentionally ignored.
    n_keep = min(xlen, n_leaf - 1)
    leaves_e = jnp.full((n_tot, n_leaf), -1.0, jnp.float32)
    leaves_e = leaves_e.at[:, :n_keep].set(x[:, :n_keep].astype(jnp.float32))
    c = constw.astype(jnp.float32)
    const_val = c + (1.0 - jnp.abs(c)) ** 2 * cnoise.astype(jnp.float32) * 0.125
    leaves_e = leaves_e.at[:, n_leaf - 1].set(const_val)
    leaves = leaves_e.reshape(rows, LANES)       # lane-pack tpr trees per row

    # ---- single fused weight stream w_a = 0.5*(1 + p + (1-|p|)^2*n*0.125) ----
    # (fuses into the expansion pass that was already materializing (nsb,rows,128))
    p = selw.astype(jnp.float32)[:, :, None]                     # (n_tot, nsb, 1)
    s = p + (1.0 - jnp.abs(p)) ** 2 * noise.astype(jnp.float32) * 0.125
    w_a = 0.5 * (1.0 + s)                                        # (n_tot, nsb, n_leaf)
    wa_b = (
        w_a.reshape(rows, tpr, nsb, n_leaf)
        .transpose(2, 0, 1, 3)
        .reshape(nsb, rows, LANES)
    )

    grid = (rows // eff_br,)
    out = pl.pallas_call(
        switchbox_kernel,
        out_shape=jax.ShapeDtypeStruct((rows, LANES), jnp.float32),
        grid=grid,
        in_specs=[
            pl.BlockSpec((eff_br, LANES), lambda r: (r, 0)),
            pl.BlockSpec((nsb, eff_br, LANES), lambda r: (0, r, 0)),
        ],
        out_specs=pl.BlockSpec((eff_br, LANES), lambda r: (r, 0)),
        compiler_params=pltpu.CompilerParams(dimension_semantics=("parallel",)),
    )(leaves, wa_b)

    # Result of tree t in row r sits at lane t * n_leaf (lane-dense unmasked store;
    # the strided extraction here fuses into the jitted wrapper).
    results = out.reshape(rows, tpr, n_leaf)[:, :, 0].reshape(n_tot)
    return results[:N]


def reference_forward(x, selw, constw, noise, cnoise):
    """Pure-JAX mirror of the PyTorch nested-loop forward for ONE element."""
    nsb = selw.shape[0]
    n_leaf = 1 << nsb
    xlen = x.shape[0]
    prev = x.astype(jnp.float32)
    if xlen + 1 < n_leaf:
        prev = jnp.concatenate([prev, -jnp.ones((n_leaf - 1 - xlen,), jnp.float32)])
    for sel in range(nsb):
        num_muxes = 1 << (nsb - sel - 1)
        nxt = []
        for mux_i in range(num_muxes):
            lane = mux_i * (1 << (sel + 1))      # operand-a lane within the tree
            p = selw[sel]
            s = p + (1.0 - jnp.abs(p)) ** 2 * noise[sel, lane] * 0.125
            a = prev[2 * mux_i]
            if sel == 0 and mux_i == num_muxes - 1:
                b = constw + (1.0 - jnp.abs(constw)) ** 2 * cnoise * 0.125
            else:
                b = prev[2 * mux_i + 1]
            nxt.append(0.5 * (s * a - s * b + a + b))
        prev = jnp.stack(nxt)
    return prev[0]


def _make_inputs(key, N, nsb, xlen):
    n_leaf = 1 << nsb
    k_x, k_sel, k_const, k_noise, k_cnoise = jax.random.split(key, 5)
    mux_selector_weights = 0.005 * jax.random.normal(k_sel, (N, nsb), jnp.float32)
    trained_const_weight = 0.005 * jax.random.normal(k_const, (N,), jnp.float32)
    noise_mat = jax.random.normal(k_noise, (N, nsb, n_leaf), jnp.float32)
    const_noise = jax.random.normal(k_cnoise, (N,), jnp.float32)
    x = jax.random.normal(k_x, (N, xlen), jnp.float32)
    return x, mux_selector_weights, trained_const_weight, noise_mat, const_noise


if __name__ == "__main__":
    key = jax.random.PRNGKey(0)
    k1, k2 = jax.random.split(key)

    num_of_weights = 5
    nsb = num_of_weights - 1          # 4 selector bits -> 16-leaf mux tree

    ref_fn = jax.jit(jax.vmap(reference_forward))

    # Case 1: batch of 128 elements, xlen < 2**nsb - 1 exercises the -1.0 padding path.
    args1 = _make_inputs(k1, N=128, nsb=nsb, xlen=8)
    out1 = jax.block_until_ready(switchbox_forward(*args1))
    ref1 = ref_fn(*args1)
    assert out1.shape == (128,)
    assert jnp.allclose(out1, ref1, atol=1e-5, rtol=1e-5), (out1, ref1)

    # Case 2: non-multiple batch size exercises the element/row padding path.
    args2 = _make_inputs(k2, N=300, nsb=nsb, xlen=8)
    out2 = jax.block_until_ready(switchbox_forward(*args2))
    ref2 = ref_fn(*args2)
    assert out2.shape == (300,)
    assert jnp.allclose(out2, ref2, atol=1e-5, rtol=1e-5), (out2, ref2)

    print("KERNEL_OK")
</pallas_src>

<mosaic_0001>
module attributes {stable_mosaic.version = 11 : i64} {
  func.func @switchbox_kernel(%arg0: i32, %arg1: memref<8x128xf32, #tpu.memory_space<vmem>>, %arg2: memref<4x8x128xf32, #tpu.memory_space<vmem>>, %arg3: memref<8x128xf32, #tpu.memory_space<vmem>>) attributes {dimension_semantics = [#tpu.dimension_semantics<parallel>], iteration_bounds = array<i64: 2>, scalar_prefetch = 0 : i64, scratch_operands = 0 : i64, tpu.core_type = #tpu.core_type<tc>, window_params = [{transform_indices = @transform_0, window_bounds = array<i64: 8, 128>}, {transform_indices = @transform_1, window_bounds = array<i64: 4, 8, 128>}, {transform_indices = @transform_2, window_bounds = array<i64: 8, 128>}]} {
    %c0 = arith.constant 0 : index
    %c0_0 = arith.constant 0 : index
    %0 = vector.load %arg1[%c0, %c0_0] : memref<8x128xf32, #tpu.memory_space<vmem>>, vector<8x128xf32>
    %c127_i32 = arith.constant 127 : i32
    %1 = tpu.dynamic_rotate %0 by %c127_i32 dim 1 : vector<8x128xf32>, i32 -> vector<8x128xf32>
    %c0_1 = arith.constant 0 : index
    %c0_2 = arith.constant 0 : index
    %c0_3 = arith.constant 0 : index
    %2 = vector.load %arg2[%c0_1, %c0_2, %c0_3] : memref<4x8x128xf32, #tpu.memory_space<vmem>>, vector<1x8x128xf32>
    %3 = vector.shape_cast %2 : vector<1x8x128xf32> to vector<8x128xf32>
    %4 = arith.subf %0, %1 : vector<8x128xf32>
    %5 = arith.mulf %3, %4 : vector<8x128xf32>
    %6 = arith.addf %1, %5 : vector<8x128xf32>
    %c126_i32 = arith.constant 126 : i32
    %7 = tpu.dynamic_rotate %6 by %c126_i32 dim 1 : vector<8x128xf32>, i32 -> vector<8x128xf32>
    %c1 = arith.constant 1 : index
    %c0_4 = arith.constant 0 : index
    %c0_5 = arith.constant 0 : index
    %8 = vector.load %arg2[%c1, %c0_4, %c0_5] : memref<4x8x128xf32, #tpu.memory_space<vmem>>, vector<1x8x128xf32>
    %9 = vector.shape_cast %8 : vector<1x8x128xf32> to vector<8x128xf32>
    %10 = arith.subf %6, %7 : vector<8x128xf32>
    %11 = arith.mulf %9, %10 : vector<8x128xf32>
    %12 = arith.addf %7, %11 : vector<8x128xf32>
    %c124_i32 = arith.constant 124 : i32
    %13 = tpu.dynamic_rotate %12 by %c124_i32 dim 1 : vector<8x128xf32>, i32 -> vector<8x128xf32>
    %c2 = arith.constant 2 : index
    %c0_6 = arith.constant 0 : index
    %c0_7 = arith.constant 0 : index
    %14 = vector.load %arg2[%c2, %c0_6, %c0_7] : memref<4x8x128xf32, #tpu.memory_space<vmem>>, vector<1x8x128xf32>
    %15 = vector.shape_cast %14 : vector<1x8x128xf32> to vector<8x128xf32>
    %16 = arith.subf %12, %13 : vector<8x128xf32>
    %17 = arith.mulf %15, %16 : vector<8x128xf32>
    %18 = arith.addf %13, %17 : vector<8x128xf32>
    %c120_i32 = arith.constant 120 : i32
    %19 = tpu.dynamic_rotate %18 by %c120_i32 dim 1 : vector<8x128xf32>, i32 -> vector<8x128xf32>
    %c3 = arith.constant 3 : index
    %c0_8 = arith.constant 0 : index
    %c0_9 = arith.constant 0 : index
    %20 = vector.load %arg2[%c3, %c0_8, %c0_9] : memref<4x8x128xf32, #tpu.memory_space<vmem>>, vector<1x8x128xf32>
    %21 = vector.shape_cast %20 : vector<1x8x128xf32> to vector<8x128xf32>
    %22 = arith.subf %18, %19 : vector<8x128xf32>
    %23 = arith.mulf %21, %22 : vector<8x128xf32>
    %24 = arith.addf %19, %23 : vector<8x128xf32>
    %c0_10 = arith.constant 0 : index
    %c0_11 = arith.constant 0 : index
    %25 = vector.load %arg3[%c0_10, %c0_11] : memref<8x128xf32, #tpu.memory_space<vmem>>, vector<8x128xf32>
    tpu.vector_store %arg3[%c0_10, %c0_11], %24 {strides = array<i32>} : memref<8x128xf32, #tpu.memory_space<vmem>>, vector<8x128xf32>,
    return
  }
  func.func @transform_0(%arg0: i32) -> (i32, i32) {
    %c0_i32 = arith.constant 0 : i32
    %c0_i32_0 = arith.constant 0 : i32
    return %arg0, %c0_i32 : i32, i32
  }
  func.func @transform_1(%arg0: i32) -> (i32, i32, i32) {
    %c0_i32 = arith.constant 0 : i32
    %c0_i32_0 = arith.constant 0 : i32
    %c0_i32_1 = arith.constant 0 : i32
    return %c0_i32, %arg0, %c0_i32_0 : i32, i32, i32
  }
  func.func @transform_2(%arg0: i32) -> (i32, i32) {
    %c0_i32 = arith.constant 0 : i32
    %c0_i32_0 = arith.constant 0 : i32
    return %arg0, %c0_i32 : i32, i32
  }
}

</mosaic_0001>

<llo_original>
// kernel: squeeze.1
$region0: #{squeeze.1}
  %s0 = inlined_call_operand.vmem [shape: f32[16,8], index: 0, kind: input, shape index: {}]
  %s1 = inlined_call_operand.hbm [shape: f32[128], index: 1, kind: output, shape index: {}]
  $region1: #{squeeze.1} parent=0
    #allocation0 [shape = 'u8[512]{0}', space=vmem, size = 0x400, scoped, tag = 'operand span for operand 1']
    #allocation1 [shape = 's32[1]{0}', space=sflag, size = 0x4, scoped, tag = 'scoped memory for squeeze.1']
    #allocation2 [shape = 'u8[4096]{0}', space=vmem, size = 0x1000, scoped, tag = 'scoped mem for output reshape']
    %2 = vsyncpa [#allocation1], 0
    %v3 = vld [vmem:[%s0] sm:$0x1]
    %vm4 = vcmask 64512
    %5 = vst.msk [vmem:[#allocation2] sm:$0x1] %vm4, %v3
    %s6 = scalar_lea.vmem %s0, 15
    %v7 = vld [vmem:[%s6] sm:$0x1]
    %8 = vrot.lane.b32.xlu0 %v7, 120
    %v9 = vpop.permute.xlu0 %8
    %vm10 = vcmask 1048512
    %11 = vst.msk [vmem:[#allocation2] sm:$0x1] %vm10, %v9
    %s12 = scalar_lea.vmem %s0, 14
    %v13 = vld [vmem:[%s12] sm:$0x1]
    %14 = vrot.lane.b32.xlu0 %v13, 112
    %v15 = vpop.permute.xlu0 %14
    %vm16 = vcmask 982912
    %17 = vst.msk [vmem:[#allocation2] sm:$0x1] %vm16, %v15
    %s18 = scalar_lea.vmem %s0, 13
    %v19 = vld [vmem:[%s18] sm:$0x1]
    %20 = vrot.lane.b32.xlu0 %v19, 104
    %v21 = vpop.permute.xlu0 %20
    %vm22 = vcmask 917312
    %23 = vst.msk [vmem:[#allocation2] sm:$0x1] %vm22, %v21
    %s24 = scalar_lea.vmem %s0, 12
    %v25 = vld [vmem:[%s24] sm:$0x1]
    %26 = vrot.lane.b32.xlu0 %v25, 96
    %v27 = vpop.permute.xlu0 %26
    %vm28 = vcmask 851712
    %29 = vst.msk [vmem:[#allocation2] sm:$0x1] %vm28, %v27
    %s30 = scalar_lea.vmem %s0, 11
    %v31 = vld [vmem:[%s30] sm:$0x1]
    %32 = vrot.lane.b32.xlu0 %v31, 88
    %v33 = vpop.permute.xlu0 %32
    %vm34 = vcmask 786112
    %35 = vst.msk [vmem:[#allocation2] sm:$0x1] %vm34, %v33
    %s36 = scalar_lea.vmem %s0, 10
    %v37 = vld [vmem:[%s36] sm:$0x1]
    %38 = vrot.lane.b32.xlu0 %v37, 80
    %v39 = vpop.permute.xlu0 %38
    %vm40 = vcmask 720512
    %41 = vst.msk [vmem:[#allocation2] sm:$0x1] %vm40, %v39
    %s42 = scalar_lea.vmem %s0, 9
    %v43 = vld [vmem:[%s42] sm:$0x1]
    %44 = vrot.lane.b32.xlu0 %v43, 72
    %v45 = vpop.permute.xlu0 %44
    %vm46 = vcmask 654912
    %47 = vst.msk [vmem:[#allocation2] sm:$0x1] %vm46, %v45
    %s48 = scalar_lea.vmem %s0, 8
    %v49 = vld [vmem:[%s48] sm:$0x1]
    %50 = vrot.lane.b32.xlu0 %v49, 64
    %v51 = vpop.permute.xlu0 %50
    %vm52 = vcmask 589312
    %53 = vst.msk [vmem:[#allocation2] sm:$0x1] %vm52, %v51
    %s54 = scalar_lea.vmem %s0, 7
    %v55 = vld [vmem:[%s54] sm:$0x1]
    %56 = vrot.lane.b32.xlu0 %v55, 56
    %v57 = vpop.permute.xlu0 %56
    %vm58 = vcmask 523712
    %59 = vst.msk [vmem:[#allocation2] sm:$0x1] %vm58, %v57
    %s60 = scalar_lea.vmem %s0, 6
    %v61 = vld [vmem:[%s60] sm:$0x1]
    %62 = vrot.lane.b32.xlu0 %v61, 48
    %v63 = vpop.permute.xlu0 %62
    %vm64 = vcmask 458112
    %65 = vst.msk [vmem:[#allocation2] sm:$0x1] %vm64, %v63
    %s66 = scalar_lea.vmem %s0, 5
    %v67 = vld [vmem:[%s66] sm:$0x1]
    %68 = vrot.lane.b32.xlu0 %v67, 40
    %v69 = vpop.permute.xlu0 %68
    %vm70 = vcmask 392512
    %71 = vst.msk [vmem:[#allocation2] sm:$0x1] %vm70, %v69
    %s72 = scalar_lea.vmem %s0, 4
    %v73 = vld [vmem:[%s72] sm:$0x1]
    %74 = vrot.lane.b32.xlu0 %v73, 32
    %v75 = vpop.permute.xlu0 %74
    %vm76 = vcmask 326912
    %77 = vst.msk [vmem:[#allocation2] sm:$0x1] %vm76, %v75
    %s78 = scalar_lea.vmem %s0, 3
    %v79 = vld [vmem:[%s78] sm:$0x1]
    %80 = vrot.lane.b32.xlu0 %v79, 24
    %v81 = vpop.permute.xlu0 %80
    %vm82 = vcmask 261312
    %83 = vst.msk [vmem:[#allocation2] sm:$0x1] %vm82, %v81
    %s84 = scalar_lea.vmem %s0, 2
    %v85 = vld [vmem:[%s84] sm:$0x1]
    %86 = vrot.lane.b32.xlu0 %v85, 16
    %v87 = vpop.permute.xlu0 %86
    %vm88 = vcmask 195712
    %89 = vst.msk [vmem:[#allocation2] sm:$0x1] %vm88, %v87
    %s90 = scalar_lea.vmem %s0, 1
    %v91 = vld [vmem:[%s90] sm:$0x1]
    %92 = vrot.lane.b32.xlu0 %v91, 8
    %v93 = vpop.permute.xlu0 %92
    %vm94 = vcmask 130112
    %95 = vst.msk [vmem:[#allocation2] sm:$0x1] %vm94, %v93
    %s97 = sshll.u32 1, 1
    %s98 = ssub.s32 %s97, 1
    %v100 = vld [vmem:[#allocation2] sm:%s98]
    %s101 = sshll.u32 1, 1
    %s102 = ssub.s32 %s101, 1
    %103 = vst [vmem:[#allocation0] sm:%s102] %v100
    %s105 = ssub.s32 16, 16
    %106 = vsyncadd [#allocation1], %s105
    %s108 = sshll.u32 [#allocation0], 4
    %s109 = int_to_ptr.vmem [resolvable:$true] %s108
    %111 = dma.vmem_to_hbm [thread:$0]  %s109, 16, %s1, [#allocation1]
    %112 = dma.done [#allocation1], 16
    %113 = vsyncpa [#allocation1], 1

// kernel: switchbox_forward.1
$region0: #{switchbox_forward.1}
  #allocation0 [shape = 'u32[]', space=smem, size = 0x4, offset = 0x4, fixed_abs, tag = 'smem constant byte address 0x4 - core index']
  #allocation1 [shape = 'u32[144,128]{1,0:T(1,128)}', space=vmem, size = 0x12000, scoped, tag = 'internal scratch']
  %s0 = inlined_call_operand.vmem [shape: f32[16,128], index: 0, kind: input, shape index: {}]
  %s1 = inlined_call_operand.vmem [shape: f32[4,16,128], index: 1, kind: input, shape index: {}]
  %s2 = inlined_call_operand.vmem [shape: f32[16,128], index: 2, kind: output, shape index: {}]
  %s3 = sld [smem:[#allocation0]]
  $region79: #{switchbox_forward.1} parent=0
    _
  %s5 = ssub.s32 1, %s3
  %s6 = scalar_select 0, %s5, %s3
  $region1: #{switchbox_forward.1} parent=0
    #allocation2 [shape = 'u8[32768]{0}', space=vmem, size = 0x8000, scoped, tag = 'input window, operand 1']
    loop: start=0, step=1, limit=4
    $region2: #{switchbox_forward.1} parent=1 // loop_pre_header
      _
    $region3: #{switchbox_forward.1} parent=1 // loop_header
      %s8 = sphi 0, %s12
      %p9 = scmp.ge.s32.totalorder %s8, 4
      %s18 = sphi 0, %s20
      %s21 = sphi 0, %s18
      %s22 = sphi 0, %s21
      %s38 = sphi 0, %s22
      %s44 = sphi 0, %s46
      %s47 = sphi 0, %s44
      %s48 = sphi 0, %s47
      %s64 = sphi 0, %s48
      %s70 = sphi 0, %s72
      %s73 = sphi 0, %s70
      %s74 = sphi 0, %s73
      %s90 = sphi 0, %s74
    $region4: #{switchbox_forward.1} parent=1 // loop_header_branch
      %11 = sbr.rel (%p9) target = $region8
    $region5: #{switchbox_forward.1} parent=1 // loop_body
      %s13 = ssub.s32 %s8, 1
      %s14 = ssub.s32 %s8, 2
      %s15 = sadd.s32 %s8, 1
      %s16 = ssub.s32 %s8, %s15
      %p17 = scmp.eq.s32.totalorder %s16, 0
      %s19 = sadd.s32 %s18, 1
      %s20 = scalar_select %p17, %s18, %s19
      %p23 = pneg %p17
      %p24 = scmp.eq.s32.totalorder %s8, 1
      %p25 = por %p23, %p24
      %p26 = scmp.ne.s32.totalorder %s18, %s21
      %p27 = scmp.eq.s32.totalorder %s8, 0
      %p28 = por %p26, %p27
      %p29 = scmp.ne.s32.totalorder %s18, %s21
      %p30 = scmp.eq.s32.totalorder %s13, 1
      %p31 = por %p29, %p30
      %p32 = scmp.ne.s32.totalorder %s21, %s22
      %p33 = scmp.eq.s32.totalorder %s13, 0
      %p34 = por %p32, %p33
      %p35 = scmp.ne.s32.totalorder %s21, %s22
      %p36 = scmp.eq.s32.totalorder %s14, 1
      %p37 = por %p35, %p36
      %p39 = scmp.ne.s32.totalorder %s22, %s38
      %p40 = scmp.eq.s32.totalorder %s14, 0
      %p41 = por %p39, %p40
      %s42 = ssub.s32 %s8, %s15
      %p43 = scmp.eq.s32.totalorder %s42, 0
      %s45 = sadd.s32 %s44, 1
      %s46 = scalar_select %p43, %s44, %s45
      %p49 = pneg %p43
      %p50 = scmp.eq.s32.totalorder %s8, 1
      %p51 = por %p49, %p50
      %p52 = scmp.ne.s32.totalorder %s44, %s47
      %p53 = scmp.eq.s32.totalorder %s8, 0
      %p54 = por %p52, %p53
      %p55 = scmp.ne.s32.totalorder %s44, %s47
      %p56 = scmp.eq.s32.totalorder %s13, 1
      %p57 = por %p55, %p56
      %p58 = scmp.ne.s32.totalorder %s47, %s48
      %p59 = scmp.eq.s32.totalorder %s13, 0
      %p60 = por %p58, %p59
      %p61 = scmp.ne.s32.totalorder %s47, %s48
      %p62 = scmp.eq.s32.totalorder %s14, 1
      %p63 = por %p61, %p62
      %p65 = scmp.ne.s32.totalorder %s48, %s64
      %p66 = scmp.eq.s32.totalorder %s14, 0
      %p67 = por %p65, %p66
      %s68 = ssub.s32 %s8, %s15
      %p69 = scmp.eq.s32.totalorder %s68, 0
      %s71 = sadd.s32 %s70, 1
      %s72 = scalar_select %p69, %s70, %s71
      %p75 = pneg %p69
      %p76 = scmp.eq.s32.totalorder %s8, 1
      %p77 = por %p75, %p76
      %p78 = scmp.ne.s32.totalorder %s70, %s73
      %p79 = scmp.eq.s32.totalorder %s8, 0
      %p80 = por %p78, %p79
      %p81 = scmp.ne.s32.totalorder %s70, %s73
      %p82 = scmp.eq.s32.totalorder %s13, 1
      %p83 = por %p81, %p82
      %p84 = scmp.ne.s32.totalorder %s73, %s74
      %p85 = scmp.eq.s32.totalorder %s13, 0
      %p86 = por %p84, %p85
      %p87 = scmp.ne.s32.totalorder %s73, %s74
      %p88 = scmp.eq.s32.totalorder %s14, 1
      %p89 = por %p87, %p88
      %p91 = scmp.ne.s32.totalorder %s74, %s90
      %p92 = scmp.eq.s32.totalorder %s14, 0
      %p93 = por %p91, %p92
      %p94 = scmp.le.s32.totalorder 1, %s8
      %p95 = scmp.lt.s32.totalorder %s8, 3
      %p96 = pnand %p94, %p95
      %p97 = pneg %p96
      // Predicated region
      $region9: #{switchbox_forward.1} parent=5 // pred_check
        _
      $region10: #{switchbox_forward.1} parent=5 // pred_check_branch
        %99 = sbr.rel (%p96) target = $region12
      $region11: #{switchbox_forward.1} parent=5 // pred_region
        %s100 = ssub.s32 %s8, 1
      $region12: #{switchbox_forward.1} parent=5 // pred_fallthru
        _
      %p101 = scmp.lt.s32.totalorder %s8, 2
      // Predicated region
      $region13: #{switchbox_forward.1} parent=5 // pred_check
        %p102 = pneg %p101
      $region14: #{switchbox_forward.1} parent=5 // pred_check_branch
        %104 = sbr.rel (%p102) target = $region16
      $region15: #{switchbox_forward.1} parent=5 // pred_region
        // Predicated region
        $region17: #{switchbox_forward.1} parent=15 // pred_check
          %p105 = pneg %p28
        $region18: #{switchbox_forward.1} parent=15 // pred_check_branch
          %107 = sbr.rel (%p105) target = $region20
        $region19: #{switchbox_forward.1} parent=15 // pred_region
          %p108 = scmp.lt.s32.totalorder %s8, 1
          %s109 = scalar_select %p108, %s8, 1
          %s110 = smul.addr %s109, 8
          %s111 = scalar_lea.vmem %s0, %s110
        $region20: #{switchbox_forward.1} parent=15 // pred_fallthru
          _
        // Predicated region
        $region21: #{switchbox_forward.1} parent=15 // pred_check
          %p112 = pneg %p54
        $region22: #{switchbox_forward.1} parent=15 // pred_check_branch
          %114 = sbr.rel (%p112) target = $region24
        $region23: #{switchbox_forward.1} parent=15 // pred_region
          %s115 = sand.u32 %s44, 1
          %s116 = sand.u32 %s44, 1
          %s117 = smul.addr %s116, 32
          %s118 = scalar_lea.vmem [#allocation2], %s117
          %s119 = smul.addr %s8, 8
          %s120 = scalar_lea.vmem %s1, %s119
          // Predicated region
          $region25: #{switchbox_forward.1} parent=23 // pred_check
            _
          $region26: #{switchbox_forward.1} parent=23 // pred_check_branch
            %122 = sbr.rel (0) target = $region28
          $region27: #{switchbox_forward.1} parent=23 // pred_region
            // Predicated region
            $region29: #{switchbox_forward.1} parent=27 // pred_check
              _
            $region30: #{switchbox_forward.1} parent=27 // pred_check_branch
              %124 = sbr.rel (0) target = $region32
            $region31: #{switchbox_forward.1} parent=27 // pred_region
              // Predicated region
              $region44: #{switchbox_forward.1} parent=31 // pred_check
                _
              $region45: #{switchbox_forward.1} parent=31 // pred_check_branch
                %146 = sbr.rel (0) target = $region47
              $region46: #{switchbox_forward.1} parent=31 // pred_region
                loop: start=0, step=1, limit=1
                $region48: #{switchbox_forward.1} parent=46 // loop_pre_header
                  _
                $region49: #{switchbox_forward.1} parent=46 // loop_header
                  %s148 = sphi 0, %s152
                  %p149 = scmp.ge.s32.totalorder %s148, 1
                  %s153 = sphi %s120, %s120
                  %s154 = sphi %s118, %s118
                $region50: #{switchbox_forward.1} parent=46 // loop_header_branch
                  %151 = sbr.rel (%p149) target = $region54
                $region51: #{switchbox_forward.1} parent=46 // loop_body
                  %v155 = vld [vmem:[%s153] sm:$0xff]
                  %156 = vst [vmem:[%s154] sm:$0xff] %v155
                  %v157 = vld [vmem:[%s153 + $0x10] sm:$0xff]
                  %158 = vst [vmem:[%s154 + $0x8] sm:$0xff] %v157
                  %v159 = vld [vmem:[%s153 + $0x20] sm:$0xff]
                  %160 = vst [vmem:[%s154 + $0x10] sm:$0xff] %v159
                  %v161 = vld [vmem:[%s153 + $0x30] sm:$0xff]
                  %162 = vst [vmem:[%s154 + $0x18] sm:$0xff] %v161
                $region52: #{switchbox_forward.1} parent=46 // loop_footer
                  %s152 = sadd.s32 1, %s148
                $region53: #{switchbox_forward.1} parent=46 // loop_footer_branch
                  %147 = sbr.rel target = $region49
                $region54: #{switchbox_forward.1} parent=46 // loop_exit
                  _
              $region47: #{switchbox_forward.1} parent=31 // pred_fallthru
                _
              // Predicated region
              $region55: #{switchbox_forward.1} parent=31 // pred_check
                _
              $region56: #{switchbox_forward.1} parent=31 // pred_check_branch
                %164 = sbr.rel target = $region58
              $region57: #{switchbox_forward.1} parent=31 // pred_region
                _
              $region58: #{switchbox_forward.1} parent=31 // pred_fallthru
                _
            $region32: #{switchbox_forward.1} parent=27 // pred_fallthru
              _
            // Predicated region
            $region33: #{switchbox_forward.1} parent=27 // pred_check
              _
            $region34: #{switchbox_forward.1} parent=27 // pred_check_branch
              %126 = sbr.rel target = $region36
            $region35: #{switchbox_forward.1} parent=27 // pred_region
              %s128 = ssub.s32 256, 1
              loop: start=0, step=1, limit=1
              $region37: #{switchbox_forward.1} parent=35 // loop_pre_header
                _
              $region38: #{switchbox_forward.1} parent=35 // loop_header
                %s130 = sphi 0, %s134
                %p131 = scmp.ge.s32.totalorder %s130, 1
                %s135 = sphi %s120, %s120
                %s136 = sphi %s118, %s118
              $region39: #{switchbox_forward.1} parent=35 // loop_header_branch
                %133 = sbr.rel (%p131) target = $region43
              $region40: #{switchbox_forward.1} parent=35 // loop_body
                %v137 = vld [vmem:[%s135] sm:%s128]
                %138 = vst [vmem:[%s136] sm:%s128] %v137
                %v139 = vld [vmem:[%s135 + $0x10] sm:%s128]
                %140 = vst [vmem:[%s136 + $0x8] sm:%s128] %v139
                %v141 = vld [vmem:[%s135 + $0x20] sm:%s128]
                %142 = vst [vmem:[%s136 + $0x10] sm:%s128] %v141
                %v143 = vld [vmem:[%s135 + $0x30] sm:%s128]
                %144 = vst [vmem:[%s136 + $0x18] sm:%s128] %v143
              $region41: #{switchbox_forward.1} parent=35 // loop_footer
                %s134 = sadd.s32 1, %s130
              $region42: #{switchbox_forward.1} parent=35 // loop_footer_branch
                %129 = sbr.rel target = $region38
              $region43: #{switchbox_forward.1} parent=35 // loop_exit
                _
            $region36: #{switchbox_forward.1} parent=27 // pred_fallthru
              _
          $region28: #{switchbox_forward.1} parent=23 // pred_fallthru
            _
          %165 = vnop
        $region24: #{switchbox_forward.1} parent=15 // pred_fallthru
          _
      $region16: #{switchbox_forward.1} parent=5 // pred_fallthru
        _
      %p166 = scmp.le.s32.totalorder 1, %s8
      %p167 = scmp.lt.s32.totalorder %s8, 3
      %p168 = pnand %p166, %p167
      %p169 = pneg %p168
      // Predicated region
      $region59: #{switchbox_forward.1} parent=5 // pred_check
        _
      $region60: #{switchbox_forward.1} parent=5 // pred_check_branch
        %171 = sbr.rel (%p168) target = $region62
      $region61: #{switchbox_forward.1} parent=5 // pred_region
        %s172 = ssub.s32 %s8, 1
        %s173 = sand.u32 %s47, 1
        %s174 = sand.u32 %s47, 1
        %s175 = smul.addr %s174, 32
        %s176 = scalar_lea.vmem [#allocation2], %s175
        // Predicated region
        $region63: #{switchbox_forward.1} parent=61 // pred_check
          %p177 = pneg %p60
        $region64: #{switchbox_forward.1} parent=61 // pred_check_branch
          %179 = sbr.rel (%p177) target = $region66
        $region65: #{switchbox_forward.1} parent=61 // pred_region
          _
        $region66: #{switchbox_forward.1} parent=61 // pred_fallthru
          _
        %p180 = scmp.lt.s32.totalorder %s13, 1
        %s181 = scalar_select %p180, %s13, 1
        %s182 = smul.addr %s181, 8
        %s183 = scalar_lea.vmem %s0, %s182
        %p184 = pneg %p34
        %p185 = pneg %p31
        %s186 = sand.u32 %s47, 1
        %s187 = sand.u32 %s47, 1
        %s188 = smul.addr %s187, 32
        %s189 = scalar_lea.vmem [#allocation2], %s188
        %p190 = pneg %p60
        %p191 = pneg %p57
        %p192 = pneg %p86
        %p193 = pneg %p83
        %p194 = scmp.lt.s32.totalorder %s13, 1
        %s195 = scalar_select %p194, %s13, 1
        %s196 = smul.addr %s195, 8
        %s197 = scalar_lea.vmem %s2, %s196
        %p198 = scmp.lt.s32.totalorder %s13, 1
        %s199 = scalar_select %p198, %s13, 1
        %s200 = smul.addr %s199, 8
        %s201 = scalar_lea.vmem %s0, %s200
        %p202 = scmp.lt.s32.totalorder %s13, 1
        %s203 = scalar_select %p202, %s13, 1
        %s204 = smul.addr %s203, 8
        %s205 = scalar_lea.vmem %s2, %s204
        %v206 = vld [vmem:[%s201] sm:$0xff]
        %207 = vrot.lane.b32.xlu0 %v206, 127
        %v208 = vpop.permute.xlu0 %207
        %v209 = vld [vmem:[%s176] sm:$0xff]
        %v210 = vsub.f32 %v206, %v208
        %v211 = vmul.f32 %v209, %v210
        %v212 = vadd.f32 %v208, %v211
        %213 = vrot.lane.b32.xlu0 %v212, 126
        %v214 = vpop.permute.xlu0 %213
        %s215 = scalar_lea.vmem %s176, 8 [#allocation2]
        %v216 = vld [vmem:[%s215] sm:$0xff]
        %v217 = vsub.f32 %v212, %v214
        %v218 = vmul.f32 %v216, %v217
        %v219 = vadd.f32 %v214, %v218
        %220 = vrot.lane.b32.xlu0 %v219, 124
        %v221 = vpop.permute.xlu0 %220
        %s222 = scalar_lea.vmem %s176, 16 [#allocation2]
        %v223 = vld [vmem:[%s222] sm:$0xff]
        %v224 = vsub.f32 %v219, %v221
        %v225 = vmul.f32 %v223, %v224
        %v226 = vadd.f32 %v221, %v225
        %227 = vrot.lane.b32.xlu0 %v226, 120
        %v228 = vpop.permute.xlu0 %227
        %s229 = scalar_lea.vmem %s176, 24 [#allocation2]
        %v230 = vld [vmem:[%s229] sm:$0xff]
        %v231 = vsub.f32 %v226, %v228
        %v232 = vmul.f32 %v230, %v231
        %v233 = vadd.f32 %v228, %v232
        %234 = vst [vmem:[%s205] sm:$0xff] %v233
        %p235 = scmp.lt.s32.totalorder %s13, 1
        %s236 = scalar_select %p235, %s13, 1
        %s237 = smul.addr %s236, 8
        %s238 = scalar_lea.vmem %s2, %s237
        // Predicated region
        $region67: #{switchbox_forward.1} parent=61 // pred_check
          %p239 = pneg %p83
        $region68: #{switchbox_forward.1} parent=61 // pred_check_branch
          %241 = sbr.rel (%p239) target = $region70
        $region69: #{switchbox_forward.1} parent=61 // pred_region
          _
        $region70: #{switchbox_forward.1} parent=61 // pred_fallthru
          _
      $region62: #{switchbox_forward.1} parent=5 // pred_fallthru
        _
      %p242 = scmp.le.s32.totalorder 2, %s8
      // Predicated region
      $region71: #{switchbox_forward.1} parent=5 // pred_check
        %p243 = pneg %p242
      $region72: #{switchbox_forward.1} parent=5 // pred_check_branch
        %245 = sbr.rel (%p243) target = $region74
      $region73: #{switchbox_forward.1} parent=5 // pred_region
        %s246 = ssub.s32 %s8, 2
        // Predicated region
        $region75: #{switchbox_forward.1} parent=73 // pred_check
          %p247 = pneg %p89
        $region76: #{switchbox_forward.1} parent=73 // pred_check_branch
          %249 = sbr.rel (%p247) target = $region78
        $region77: #{switchbox_forward.1} parent=73 // pred_region
          %p250 = scmp.lt.s32.totalorder %s14, 1
          %s251 = scalar_select %p250, %s14, 1
          %s252 = smul.addr %s251, 8
          %s253 = scalar_lea.vmem %s2, %s252
        $region78: #{switchbox_forward.1} parent=73 // pred_fallthru
          _
      $region74: #{switchbox_forward.1} parent=5 // pred_fallthru
        _
    $region6: #{switchbox_forward.1} parent=1 // loop_footer
      %s12 = sadd.s32 1, %s8
    $region7: #{switchbox_forward.1} parent=1 // loop_footer_branch
      %7 = sbr.rel target = $region3
    $region8: #{switchbox_forward.1} parent=1 // loop_exit
      _

</llo_original>
